<compile_context>
chip_gen: v6e
topology: v6e:2x2x1
jax: 0.10.0
libtpu: 0.0.40
codegen_flags: <defaults>
</compile_context>

<pallas_src>
import functools

import jax
import jax.numpy as jnp
from jax.experimental import pallas as pl
from jax.experimental.pallas import tpu as pltpu

_LANES = 128                      # vreg lane width; batch tiles are multiples of this
_MIN_GRID_STEPS = 8               # target grid steps so v7x's 2 TCs each get >=3-4 blocks
_VMEM_BUDGET = 32 * 1024 * 1024   # default scoped-VMEM limit (smallest default across gens)


def _round_up(a: int, m: int) -> int:
    return (a + m - 1) // m * m


def _stoch_trans_kernel(xT_ref, w1T_ref, w2T_ref, whT_ref, b12T_ref, bhT_ref,
                        locT_ref, scaleT_ref):
    """All operands are transposed: feature dims on sublanes, batch on lanes."""
    xT = xT_ref[...]                                            # [in, tb]

    # Layer 1: tanh(W1^T @ x^T + b1)        (MXU + lane-dense EUP tanh)
    h1T = jnp.tanh(
        jnp.dot(w1T_ref[...], xT, preferred_element_type=jnp.float32)
        + b12T_ref[:, 0:1])                                     # [hid, tb]

    # Layer 2: tanh(W2^T @ h1^T + b2)
    h2T = jnp.tanh(
        jnp.dot(w2T_ref[...], h1T, preferred_element_type=jnp.float32)
        + b12T_ref[:, 1:2])                                     # [hid, tb]

    # Fused heads: one matmul gives [loc ; pre_scale] stacked on sublanes.
    headsT = (
        jnp.dot(whT_ref[...], h2T, preferred_element_type=jnp.float32)
        + bhT_ref[...])                                         # [2*out, tb]

    out_dim = locT_ref.shape[0]                                 # static
    # out_dim == 8 -> the split sits on an (8,128) sublane-tile boundary: free.
    locT_ref[...] = headsT[:out_dim, :]
    scaleT_ref[...] = jnp.exp(headsT[out_dim:, :])              # exp on scale half only


def pack_params(params):
    """Pack/transpose raw params for the lane-dense (batch-on-lanes) kernel.

    Input params use the [in, out] / [1, out] layout of init_params (i.e. the
    transpose of torch Linear.weight); the kernel consumes W^T and column
    biases so the batch axis stays on lanes end-to-end.
    """
    return {
        "w1T": params["w1"].T,                                        # [hid, in]
        "w2T": params["w2"].T,                                        # [hid, hid]
        "whT": jnp.concatenate(
            [params["w_loc"].T, params["w_scale"].T], axis=0),        # [2*out, hid]
        "b12T": jnp.concatenate(
            [params["b1"].T, params["b2"].T], axis=1),                # [hid, 2]
        "bhT": jnp.concatenate(
            [params["b_loc"], params["b_scale"]], axis=1).T,          # [2*out, 1]
    }


@functools.partial(jax.jit, static_argnames=("tile_b",))
def stoch_trans_forward(x, packed, *, tile_b: int = 1024):
    """x: [B, input_dim] f32. packed: output of pack_params(). -> (loc, scale)."""
    B, input_dim = x.shape
    hidden = packed["w1T"].shape[0]
    two_out = packed["whT"].shape[0]
    out_dim = two_out // 2

    # ---- batch tiling (batch lives on the lane axis inside the kernel) ----
    # Balanced tiles (padding waste < _LANES rows per tile); when B is large
    # enough, keep at least _MIN_GRID_STEPS blocks so v7x's two TensorCores
    # both get work and the pipeline hides prologue/epilogue DMA.
    n_tiles = max(pl.cdiv(B, tile_b), min(_MIN_GRID_STEPS, pl.cdiv(B, _LANES)), 1)
    tb = _round_up(pl.cdiv(B, n_tiles), _LANES)

    # Cap the tile so double-buffered xT + locT + scaleT tiles plus the
    # resident weights stay inside the default scoped-VMEM limit (matters
    # only for huge tile_b sweeps; ~50 KB/step at the module's default dims).
    weight_bytes = 4 * (hidden * input_dim + hidden * hidden
                        + two_out * hidden + 2 * hidden + two_out)
    bytes_per_lane = 2 * 4 * (input_dim + two_out)      # double-buffered f32 tiles
    max_tb = max(_LANES,
                 (_VMEM_BUDGET - weight_bytes) // bytes_per_lane // _LANES * _LANES)
    tb = min(tb, max_tb)

    n_tiles = pl.cdiv(B, tb)
    b_pad = n_tiles * tb

    # Pre-transpose + pad once in the wrapper so every in-kernel op is
    # lane-dense; padded lanes produce finite values and are dropped below.
    xT = jnp.pad(x.T, ((0, 0), (0, b_pad - B)))          # [in, b_pad]

    cost = pl.CostEstimate(
        flops=2 * b_pad * (input_dim * hidden + hidden * hidden + hidden * two_out),
        transcendentals=b_pad * (2 * hidden + out_dim),
        bytes_accessed=4 * b_pad * (input_dim + two_out) + weight_bytes,
    )

    locT, scaleT = pl.pallas_call(
        _stoch_trans_kernel,
        out_shape=(jax.ShapeDtypeStruct((out_dim, b_pad), jnp.float32),
                   jax.ShapeDtypeStruct((out_dim, b_pad), jnp.float32)),
        grid=(n_tiles,),
        in_specs=[
            pl.BlockSpec((input_dim, tb), lambda i: (0, i)),      # x^T (tiled on lanes)
            pl.BlockSpec((hidden, input_dim), lambda i: (0, 0)),  # W1^T (resident)
            pl.BlockSpec((hidden, hidden), lambda i: (0, 0)),     # W2^T (resident)
            pl.BlockSpec((two_out, hidden), lambda i: (0, 0)),    # [W_loc;W_scale]^T
            pl.BlockSpec((hidden, 2), lambda i: (0, 0)),          # [b1 | b2] columns
            pl.BlockSpec((two_out, 1), lambda i: (0, 0)),         # [b_loc;b_scale] column
        ],
        out_specs=(
            pl.BlockSpec((out_dim, tb), lambda i: (0, i)),        # loc^T
            pl.BlockSpec((out_dim, tb), lambda i: (0, i)),        # scale^T
        ),
        compiler_params=pltpu.CompilerParams(
            dimension_semantics=("parallel",),
        ),
        cost_estimate=cost,
    )(xT, packed["w1T"], packed["w2T"], packed["whT"],
      packed["b12T"], packed["bhT"])

    # Relayout to the module's [B, output_dim] interface.  Consumers that can
    # read the transposed [output_dim, B] layout directly can skip this step.
    return locT.T[:B], scaleT.T[:B]


def init_params(key, output_dim, input_dim, hidden_dim):
    """Deterministic synthetic params (PyTorch-Linear-style uniform init).

    Weights stored as [in, out] (transpose of torch's [out, in]) so the
    reference computes x @ W + b; biases stored as [1, out] rows.
    """
    ks = jax.random.split(key, 8)

    def linear(kw, kb, fan_in, fan_out):
        bound = 1.0 / jnp.sqrt(fan_in)
        w = jax.random.uniform(kw, (fan_in, fan_out), jnp.float32, -bound, bound)
        b = jax.random.uniform(kb, (1, fan_out), jnp.float32, -bound, bound)
        return w, b

    w1, b1 = linear(ks[0], ks[1], input_dim, hidden_dim)
    w2, b2 = linear(ks[2], ks[3], hidden_dim, hidden_dim)
    wl, bl = linear(ks[4], ks[5], hidden_dim, output_dim)
    ws, bs = linear(ks[6], ks[7], hidden_dim, output_dim)
    return {
        "w1": w1, "b1": b1,
        "w2": w2, "b2": b2,
        "w_loc": wl, "b_loc": bl,
        "w_scale": ws, "b_scale": bs,
    }


def _reference_forward(x, p):
    h1 = jnp.tanh(x @ p["w1"] + p["b1"])
    h2 = jnp.tanh(h1 @ p["w2"] + p["b2"])
    loc = h2 @ p["w_loc"] + p["b_loc"]
    scale = jnp.exp(h2 @ p["w_scale"] + p["b_scale"])
    return loc, scale


if __name__ == "__main__":
    # Shapes consistent with the module: input_dim=16, hidden_dim=32,
    # output_dim=8.  Batch 512 keeps things small; the default path runs a
    # 4-step grid (min-grid-steps rule), and the second call exercises the
    # padding path (B=397, 128-lane tiles).
    batch, input_dim, hidden_dim, output_dim = 512, 16, 32, 8

    key = jax.random.PRNGKey(0)
    k_x, k_p = jax.random.split(key)

    x = jax.random.normal(k_x, (batch, input_dim), jnp.float32)
    params = init_params(k_p, output_dim, input_dim, hidden_dim)
    packed = pack_params(params)

    loc, scale = stoch_trans_forward(x, packed)                   # default tile_b=1024
    jax.block_until_ready((loc, scale))

    # Non-multiple batch (padding path) + explicit small tile (multi-step grid).
    loc_s, scale_s = stoch_trans_forward(x[:397], packed, tile_b=128)
    jax.block_until_ready((loc_s, scale_s))

    # Sanity check against a pure-JAX reference of the same math.
    ref_loc, ref_scale = _reference_forward(x, params)
    assert loc.shape == (batch, output_dim) and scale.shape == (batch, output_dim)
    assert jnp.allclose(loc, ref_loc, atol=1e-5, rtol=1e-4)
    assert jnp.allclose(scale, ref_scale, atol=1e-5, rtol=1e-4)
    assert jnp.allclose(loc_s, ref_loc[:397], atol=1e-5, rtol=1e-4)
    assert jnp.allclose(scale_s, ref_scale[:397], atol=1e-5, rtol=1e-4)

    print("KERNEL_OK")
</pallas_src>

<mosaic_0001>
module attributes {stable_mosaic.version = 11 : i64} {
  func.func @_stoch_trans_kernel(%arg0: i32, %arg1: memref<16x128xf32, #tpu.memory_space<vmem>>, %arg2: memref<32x16xf32, #tpu.memory_space<vmem>>, %arg3: memref<32x32xf32, #tpu.memory_space<vmem>>, %arg4: memref<16x32xf32, #tpu.memory_space<vmem>>, %arg5: memref<32x2xf32, #tpu.memory_space<vmem>>, %arg6: memref<16x1xf32, #tpu.memory_space<vmem>>, %arg7: memref<8x128xf32, #tpu.memory_space<vmem>>, %arg8: memref<8x128xf32, #tpu.memory_space<vmem>>) attributes {dimension_semantics = [#tpu.dimension_semantics<parallel>], iteration_bounds = array<i64: 4>, scalar_prefetch = 0 : i64, scratch_operands = 0 : i64, tpu.core_type = #tpu.core_type<tc>, window_params = [{transform_indices = @transform_0, window_bounds = array<i64: 16, 128>}, {pipeline_mode = #tpu.pipeline_mode<synchronous>, transform_indices = @transform_1, window_bounds = array<i64: 32, 16>}, {pipeline_mode = #tpu.pipeline_mode<synchronous>, transform_indices = @transform_2, window_bounds = array<i64: 32, 32>}, {pipeline_mode = #tpu.pipeline_mode<synchronous>, transform_indices = @transform_3, window_bounds = array<i64: 16, 32>}, {pipeline_mode = #tpu.pipeline_mode<synchronous>, transform_indices = @transform_4, window_bounds = array<i64: 32, 2>}, {pipeline_mode = #tpu.pipeline_mode<synchronous>, transform_indices = @transform_5, window_bounds = array<i64: 16, 1>}, {transform_indices = @transform_6, window_bounds = array<i64: 8, 128>}, {transform_indices = @transform_7, window_bounds = array<i64: 8, 128>}]} {
    %c0 = arith.constant 0 : index
    %c0_0 = arith.constant 0 : index
    %0 = vector.load %arg1[%c0, %c0_0] : memref<16x128xf32, #tpu.memory_space<vmem>>, vector<16x128xf32>
    %c0_1 = arith.constant 0 : index
    %c0_2 = arith.constant 0 : index
    %1 = vector.load %arg2[%c0_1, %c0_2] : memref<32x16xf32, #tpu.memory_space<vmem>>, vector<32x16xf32>
    %cst = arith.constant dense<0.000000e+00> : vector<32x128xf32>
    %2 = tpu.matmul %1, %0, %cst {dimension_numbers = #tpu.dot_dimension_numbers<[1], [0], [0], [1], [0, 0, 1, 1], [], []>} : vector<32x16xf32>, vector<16x128xf32>, vector<32x128xf32> -> vector<32x128xf32>
    %c0_3 = arith.constant 0 : index
    %c0_4 = arith.constant 0 : index
    %3 = vector.load %arg5[%c0_3, %c0_4] : memref<32x2xf32, #tpu.memory_space<vmem>>, vector<32x1xf32>
    %4 = vector.broadcast %3 : vector<32x1xf32> to vector<32x128xf32>
    %5 = arith.addf %2, %4 : vector<32x128xf32>
    %6 = math.tanh %5 : vector<32x128xf32>
    %c0_5 = arith.constant 0 : index
    %c0_6 = arith.constant 0 : index
    %7 = vector.load %arg3[%c0_5, %c0_6] : memref<32x32xf32, #tpu.memory_space<vmem>>, vector<32x32xf32>
    %cst_7 = arith.constant dense<0.000000e+00> : vector<32x128xf32>
    %8 = tpu.matmul %7, %6, %cst_7 {dimension_numbers = #tpu.dot_dimension_numbers<[1], [0], [0], [1], [0, 0, 1, 1], [], []>} : vector<32x32xf32>, vector<32x128xf32>, vector<32x128xf32> -> vector<32x128xf32>
    %c0_8 = arith.constant 0 : index
    %c1 = arith.constant 1 : index
    %9 = vector.load %arg5[%c0_8, %c1] : memref<32x2xf32, #tpu.memory_space<vmem>>, vector<32x1xf32>
    %10 = vector.broadcast %9 : vector<32x1xf32> to vector<32x128xf32>
    %11 = arith.addf %8, %10 : vector<32x128xf32>
    %12 = math.tanh %11 : vector<32x128xf32>
    %c0_9 = arith.constant 0 : index
    %c0_10 = arith.constant 0 : index
    %13 = vector.load %arg4[%c0_9, %c0_10] : memref<16x32xf32, #tpu.memory_space<vmem>>, vector<16x32xf32>
    %cst_11 = arith.constant dense<0.000000e+00> : vector<16x128xf32>
    %14 = tpu.matmul %13, %12, %cst_11 {dimension_numbers = #tpu.dot_dimension_numbers<[1], [0], [0], [1], [0, 0, 1, 1], [], []>} : vector<16x32xf32>, vector<32x128xf32>, vector<16x128xf32> -> vector<16x128xf32>
    %c0_12 = arith.constant 0 : index
    %c0_13 = arith.constant 0 : index
    %15 = vector.load %arg6[%c0_12, %c0_13] : memref<16x1xf32, #tpu.memory_space<vmem>>, vector<16x1xf32>
    %16 = vector.broadcast %15 : vector<16x1xf32> to vector<16x128xf32>
    %17 = arith.addf %14, %16 : vector<16x128xf32>
    %18 = vector.extract_strided_slice %17 {offsets = [0, 0], sizes = [8, 128], strides = [1, 1]} : vector<16x128xf32> to vector<8x128xf32>
    %c0_14 = arith.constant 0 : index
    %c0_15 = arith.constant 0 : index
    %19 = vector.load %arg7[%c0_14, %c0_15] : memref<8x128xf32, #tpu.memory_space<vmem>>, vector<8x128xf32>
    tpu.vector_store %arg7[%c0_14, %c0_15], %18 {strides = array<i32>} : memref<8x128xf32, #tpu.memory_space<vmem>>, vector<8x128xf32>,
    %20 = vector.extract_strided_slice %17 {offsets = [8, 0], sizes = [8, 128], strides = [1, 1]} : vector<16x128xf32> to vector<8x128xf32>
    %21 = math.exp %20 : vector<8x128xf32>
    %c0_16 = arith.constant 0 : index
    %c0_17 = arith.constant 0 : index
    %22 = vector.load %arg8[%c0_16, %c0_17] : memref<8x128xf32, #tpu.memory_space<vmem>>, vector<8x128xf32>
    tpu.vector_store %arg8[%c0_16, %c0_17], %21 {strides = array<i32>} : memref<8x128xf32, #tpu.memory_space<vmem>>, vector<8x128xf32>,
    return
  }
  func.func @transform_0(%arg0: i32) -> (i32, i32) {
    %c0_i32 = arith.constant 0 : i32
    %c0_i32_0 = arith.constant 0 : i32
    return %c0_i32, %arg0 : i32, i32
  }
  func.func @transform_1(%arg0: i32) -> (i32, i32) {
    %c0_i32 = arith.constant 0 : i32
    %c0_i32_0 = arith.constant 0 : i32
    %c0_i32_1 = arith.constant 0 : i32
    return %c0_i32, %c0_i32_0 : i32, i32
  }
  func.func @transform_2(%arg0: i32) -> (i32, i32) {
    %c0_i32 = arith.constant 0 : i32
    %c0_i32_0 = arith.constant 0 : i32
    %c0_i32_1 = arith.constant 0 : i32
    return %c0_i32, %c0_i32_0 : i32, i32
  }
  func.func @transform_3(%arg0: i32) -> (i32, i32) {
    %c0_i32 = arith.constant 0 : i32
    %c0_i32_0 = arith.constant 0 : i32
    %c0_i32_1 = arith.constant 0 : i32
    return %c0_i32, %c0_i32_0 : i32, i32
  }
  func.func @transform_4(%arg0: i32) -> (i32, i32) {
    %c0_i32 = arith.constant 0 : i32
    %c0_i32_0 = arith.constant 0 : i32
    %c0_i32_1 = arith.constant 0 : i32
    return %c0_i32, %c0_i32_0 : i32, i32
  }
  func.func @transform_5(%arg0: i32) -> (i32, i32) {
    %c0_i32 = arith.constant 0 : i32
    %c0_i32_0 = arith.constant 0 : i32
    %c0_i32_1 = arith.constant 0 : i32
    return %c0_i32, %c0_i32_0 : i32, i32
  }
  func.func @transform_6(%arg0: i32) -> (i32, i32) {
    %c0_i32 = arith.constant 0 : i32
    %c0_i32_0 = arith.constant 0 : i32
    return %c0_i32, %arg0 : i32, i32
  }
  func.func @transform_7(%arg0: i32) -> (i32, i32) {
    %c0_i32 = arith.constant 0 : i32
    %c0_i32_0 = arith.constant 0 : i32
    return %c0_i32, %arg0 : i32, i32
  }
}

</mosaic_0001>

<llo_original>
// kernel: stoch_trans_forward.1
$region0: #{stoch_trans_forward.1}
  #allocation0 [shape = 'u32[]', space=smem, size = 0x4, offset = 0x4, fixed_abs, tag = 'smem constant byte address 0x4 - core index']
  #allocation1 [shape = 'u32[144,128]{1,0:T(1,128)}', space=vmem, size = 0x12000, scoped, tag = 'internal scratch']
  %s0 = inlined_call_operand.vmem [shape: f32[16,512], index: 0, kind: input, shape index: {}]
  %s1 = inlined_call_operand.vmem [shape: f32[32,16], index: 1, kind: input, shape index: {}]
  %s2 = inlined_call_operand.vmem [shape: f32[32,32], index: 2, kind: input, shape index: {}]
  %s3 = inlined_call_operand.hbm [shape: f32[16,32], index: 3, kind: input, shape index: {}]
  %s4 = inlined_call_operand.vmem [shape: f32[32,2], index: 4, kind: input, shape index: {}]
  %s5 = inlined_call_operand.vmem [shape: f32[16,1], index: 5, kind: input, shape index: {}]
  %s6 = inlined_call_operand.hbm [shape: f32[8,512], index: 6, kind: output, shape index: {0}]
  %s7 = inlined_call_operand.hbm [shape: f32[8,512], index: 7, kind: output, shape index: {1}]
  %8 = xla_tuple %s6, %s7
  %s9 = sld [smem:[#allocation0]]
  $region107: #{stoch_trans_forward.1} parent=0
    _
  %s11 = ssub.s32 1, %s9
  %s12 = scalar_select 0, %s11, %s9
  $region1: #{stoch_trans_forward.1} parent=0
    #allocation2 [shape = 'u8[16384]{0}', space=vmem, size = 0x4000, scoped, tag = 'input window, operand 0']
    #allocation3 [shape = 'u8[8192]{0}', space=vmem, size = 0x2000, scoped, tag = 'input window, operand 3, single buffered']
    #allocation4 [shape = 's32[2]{0}', space=sflag, size = 0x8, scoped, tag = 'scoped memory for stoch_trans_forward.1']
    #allocation5 [shape = 's32[2]{0}', space=sflag, size = 0x8, scoped, tag = 'scoped memory for stoch_trans_forward.1']
    #allocation6 [shape = 'u8[8192]{0}', space=vmem, size = 0x2000, scoped, tag = 'output window, operand 0']
    #allocation7 [shape = 'u8[8192]{0}', space=vmem, size = 0x2000, scoped, tag = 'output window, operand 1']
    #allocation8 [shape = 's32[2]{0}', space=sflag, size = 0x8, scoped, tag = 'scoped memory for stoch_trans_forward.1']
    %13 = vsyncpa [#allocation4], 0
    %14 = vsyncpa [#allocation5], 0
    %s15 = scalar_lea.sflag [#allocation5], 1
    %16 = vsyncpa %s15, 0
    %17 = vsyncpa [#allocation8], 0
    %s18 = scalar_lea.sflag [#allocation8], 1
    %19 = vsyncpa %s18, 0
    loop: start=0, step=1, limit=6
    $region2: #{stoch_trans_forward.1} parent=1 // loop_pre_header
      _
    $region3: #{stoch_trans_forward.1} parent=1 // loop_header
      %s21 = sphi 0, %s25
      %p22 = scmp.ge.s32.totalorder %s21, 6
      %s31 = sphi 0, %s33
      %s34 = sphi 0, %s31
      %s35 = sphi 0, %s34
      %s51 = sphi 0, %s35
      %s55 = sphi 0, %s55
      %s57 = sphi 0, %s55
      %s58 = sphi 0, %s57
      %s72 = sphi 0, %s58
      %s76 = sphi 0, %s76
      %s78 = sphi 0, %s76
      %s79 = sphi 0, %s78
      %s93 = sphi 0, %s79
      %s97 = sphi 0, %s97
      %s99 = sphi 0, %s97
      %s100 = sphi 0, %s99
      %s114 = sphi 0, %s100
      %s118 = sphi 0, %s118
      %s120 = sphi 0, %s118
      %s121 = sphi 0, %s120
      %s135 = sphi 0, %s121
      %s139 = sphi 0, %s139
      %s141 = sphi 0, %s139
      %s142 = sphi 0, %s141
      %s156 = sphi 0, %s142
      %s162 = sphi 0, %s164
      %s165 = sphi 0, %s162
      %s166 = sphi 0, %s165
      %s182 = sphi 0, %s166
      %s188 = sphi 0, %s190
      %s191 = sphi 0, %s188
      %s192 = sphi 0, %s191
      %s208 = sphi 0, %s192
    $region4: #{stoch_trans_forward.1} parent=1 // loop_header_branch
      %24 = sbr.rel (%p22) target = $region8
    $region5: #{stoch_trans_forward.1} parent=1 // loop_body
      %s26 = ssub.s32 %s21, 1
      %s27 = ssub.s32 %s21, 2
      %s28 = sadd.s32 %s21, 1
      %s29 = ssub.s32 %s21, %s28
      %p30 = scmp.eq.s32.totalorder %s29, 0
      %s32 = sadd.s32 %s31, 1
      %s33 = scalar_select %p30, %s31, %s32
      %p36 = pneg %p30
      %p37 = scmp.eq.s32.totalorder %s21, 3
      %p38 = por %p36, %p37
      %p39 = scmp.ne.s32.totalorder %s31, %s34
      %p40 = scmp.eq.s32.totalorder %s21, 0
      %p41 = por %p39, %p40
      %p42 = scmp.ne.s32.totalorder %s31, %s34
      %p43 = scmp.eq.s32.totalorder %s26, 3
      %p44 = por %p42, %p43
      %p45 = scmp.ne.s32.totalorder %s34, %s35
      %p46 = scmp.eq.s32.totalorder %s26, 0
      %p47 = por %p45, %p46
      %p48 = scmp.ne.s32.totalorder %s34, %s35
      %p49 = scmp.eq.s32.totalorder %s27, 3
      %p50 = por %p48, %p49
      %p52 = scmp.ne.s32.totalorder %s35, %s51
      %p53 = scmp.eq.s32.totalorder %s27, 0
      %p54 = por %p52, %p53
      %s56 = sadd.s32 %s55, 1
      %p59 = scmp.eq.s32.totalorder %s21, 3
      %p60 = scmp.ne.s32.totalorder %s55, %s57
      %p61 = scmp.eq.s32.totalorder %s21, 0
      %p62 = por %p60, %p61
      %p63 = scmp.ne.s32.totalorder %s55, %s57
      %p64 = scmp.eq.s32.totalorder %s26, 3
      %p65 = por %p63, %p64
      %p66 = scmp.ne.s32.totalorder %s57, %s58
      %p67 = scmp.eq.s32.totalorder %s26, 0
      %p68 = por %p66, %p67
      %p69 = scmp.ne.s32.totalorder %s57, %s58
      %p70 = scmp.eq.s32.totalorder %s27, 3
      %p71 = por %p69, %p70
      %p73 = scmp.ne.s32.totalorder %s58, %s72
      %p74 = scmp.eq.s32.totalorder %s27, 0
      %p75 = por %p73, %p74
      %s77 = sadd.s32 %s76, 1
      %p80 = scmp.eq.s32.totalorder %s21, 3
      %p81 = scmp.ne.s32.totalorder %s76, %s78
      %p82 = scmp.eq.s32.totalorder %s21, 0
      %p83 = por %p81, %p82
      %p84 = scmp.ne.s32.totalorder %s76, %s78
      %p85 = scmp.eq.s32.totalorder %s26, 3
      %p86 = por %p84, %p85
      %p87 = scmp.ne.s32.totalorder %s78, %s79
      %p88 = scmp.eq.s32.totalorder %s26, 0
      %p89 = por %p87, %p88
      %p90 = scmp.ne.s32.totalorder %s78, %s79
      %p91 = scmp.eq.s32.totalorder %s27, 3
      %p92 = por %p90, %p91
      %p94 = scmp.ne.s32.totalorder %s79, %s93
      %p95 = scmp.eq.s32.totalorder %s27, 0
      %p96 = por %p94, %p95
      %s98 = sadd.s32 %s97, 1
      %p101 = scmp.eq.s32.totalorder %s21, 3
      %p102 = scmp.ne.s32.totalorder %s97, %s99
      %p103 = scmp.eq.s32.totalorder %s21, 0
      %p104 = por %p102, %p103
      %p105 = scmp.ne.s32.totalorder %s97, %s99
      %p106 = scmp.eq.s32.totalorder %s26, 3
      %p107 = por %p105, %p106
      %p108 = scmp.ne.s32.totalorder %s99, %s100
      %p109 = scmp.eq.s32.totalorder %s26, 0
      %p110 = por %p108, %p109
      %p111 = scmp.ne.s32.totalorder %s99, %s100
      %p112 = scmp.eq.s32.totalorder %s27, 3
      %p113 = por %p111, %p112
      %p115 = scmp.ne.s32.totalorder %s100, %s114
      %p116 = scmp.eq.s32.totalorder %s27, 0
      %p117 = por %p115, %p116
      %s119 = sadd.s32 %s118, 1
      %p122 = scmp.eq.s32.totalorder %s21, 3
      %p123 = scmp.ne.s32.totalorder %s118, %s120
      %p124 = scmp.eq.s32.totalorder %s21, 0
      %p125 = por %p123, %p124
      %p126 = scmp.ne.s32.totalorder %s118, %s120
      %p127 = scmp.eq.s32.totalorder %s26, 3
      %p128 = por %p126, %p127
      %p129 = scmp.ne.s32.totalorder %s120, %s121
      %p130 = scmp.eq.s32.totalorder %s26, 0
      %p131 = por %p129, %p130
      %p132 = scmp.ne.s32.totalorder %s120, %s121
      %p133 = scmp.eq.s32.totalorder %s27, 3
      %p134 = por %p132, %p133
      %p136 = scmp.ne.s32.totalorder %s121, %s135
      %p137 = scmp.eq.s32.totalorder %s27, 0
      %p138 = por %p136, %p137
      %s140 = sadd.s32 %s139, 1
      %p143 = scmp.eq.s32.totalorder %s21, 3
      %p144 = scmp.ne.s32.totalorder %s139, %s141
      %p145 = scmp.eq.s32.totalorder %s21, 0
      %p146 = por %p144, %p145
      %p147 = scmp.ne.s32.totalorder %s139, %s141
      %p148 = scmp.eq.s32.totalorder %s26, 3
      %p149 = por %p147, %p148
      %p150 = scmp.ne.s32.totalorder %s141, %s142
      %p151 = scmp.eq.s32.totalorder %s26, 0
      %p152 = por %p150, %p151
      %p153 = scmp.ne.s32.totalorder %s141, %s142
      %p154 = scmp.eq.s32.totalorder %s27, 3
      %p155 = por %p153, %p154
      %p157 = scmp.ne.s32.totalorder %s142, %s156
      %p158 = scmp.eq.s32.totalorder %s27, 0
      %p159 = por %p157, %p158
      %s160 = ssub.s32 %s21, %s28
      %p161 = scmp.eq.s32.totalorder %s160, 0
      %s163 = sadd.s32 %s162, 1
      %s164 = scalar_select %p161, %s162, %s163
      %p167 = pneg %p161
      %p168 = scmp.eq.s32.totalorder %s21, 3
      %p169 = por %p167, %p168
      %p170 = scmp.ne.s32.totalorder %s162, %s165
      %p171 = scmp.eq.s32.totalorder %s21, 0
      %p172 = por %p170, %p171
      %p173 = scmp.ne.s32.totalorder %s162, %s165
      %p174 = scmp.eq.s32.totalorder %s26, 3
      %p175 = por %p173, %p174
      %p176 = scmp.ne.s32.totalorder %s165, %s166
      %p177 = scmp.eq.s32.totalorder %s26, 0
      %p178 = por %p176, %p177
      %p179 = scmp.ne.s32.totalorder %s165, %s166
      %p180 = scmp.eq.s32.totalorder %s27, 3
      %p181 = por %p179, %p180
      %p183 = scmp.ne.s32.totalorder %s166, %s182
      %p184 = scmp.eq.s32.totalorder %s27, 0
      %p185 = por %p183, %p184
      %s186 = ssub.s32 %s21, %s28
      %p187 = scmp.eq.s32.totalorder %s186, 0
      %s189 = sadd.s32 %s188, 1
      %s190 = scalar_select %p187, %s188, %s189
      %p193 = pneg %p187
      %p194 = scmp.eq.s32.totalorder %s21, 3
      %p195 = por %p193, %p194
      %p196 = scmp.ne.s32.totalorder %s188, %s191
      %p197 = scmp.eq.s32.totalorder %s21, 0
      %p198 = por %p196, %p197
      %p199 = scmp.ne.s32.totalorder %s188, %s191
      %p200 = scmp.eq.s32.totalorder %s26, 3
      %p201 = por %p199, %p200
      %p202 = scmp.ne.s32.totalorder %s191, %s192
      %p203 = scmp.eq.s32.totalorder %s26, 0
      %p204 = por %p202, %p203
      %p205 = scmp.ne.s32.totalorder %s191, %s192
      %p206 = scmp.eq.s32.totalorder %s27, 3
      %p207 = por %p205, %p206
      %p209 = scmp.ne.s32.totalorder %s192, %s208
      %p210 = scmp.eq.s32.totalorder %s27, 0
      %p211 = por %p209, %p210
      %p212 = scmp.le.s32.totalorder 1, %s21
      %p213 = scmp.lt.s32.totalorder %s21, 5
      %p214 = pnand %p212, %p213
      %p215 = pneg %p214
      // Predicated region
      $region9: #{stoch_trans_forward.1} parent=5 // pred_check
        _
      $region10: #{stoch_trans_forward.1} parent=5 // pred_check_branch
        %217 = sbr.rel (%p214) target = $region12
      $region11: #{stoch_trans_forward.1} parent=5 // pred_region
        %s218 = ssub.s32 %s21, 1
        // Predicated region
        $region13: #{stoch_trans_forward.1} parent=11 // pred_check
          %p219 = pneg %p68
        $region14: #{stoch_trans_forward.1} parent=11 // pred_check_branch
          %221 = sbr.rel (%p219) target = $region16
        $region15: #{stoch_trans_forward.1} parent=11 // pred_region
          _
        $region16: #{stoch_trans_forward.1} parent=11 // pred_fallthru
          _
        // Predicated region
        $region17: #{stoch_trans_forward.1} parent=11 // pred_check
          %p222 = pneg %p89
        $region18: #{stoch_trans_forward.1} parent=11 // pred_check_branch
          %224 = sbr.rel (%p222) target = $region20
        $region19: #{stoch_trans_forward.1} parent=11 // pred_region
          _
        $region20: #{stoch_trans_forward.1} parent=11 // pred_fallthru
          _
        // Predicated region
        $region21: #{stoch_trans_forward.1} parent=11 // pred_check
          %p225 = pneg %p110
        $region22: #{stoch_trans_forward.1} parent=11 // pred_check_branch
          %227 = sbr.rel (%p225) target = $region24
        $region23: #{stoch_trans_forward.1} parent=11 // pred_region
          %s229 = ssub.s32 256, 256
          %230 = vsyncadd [#allocation4], %s229
          %s231 = sshll.u32 [#allocation3], 4
          %s232 = int_to_ptr.vmem [resolvable:$true] %s231
          %237 = dma.hbm_to_vmem [thread:$0]  %s3, 256, %s232, [#allocation4], 128, 128, 8
        $region24: #{stoch_trans_forward.1} parent=11 // pred_fallthru
          _
        // Predicated region
        $region25: #{stoch_trans_forward.1} parent=11 // pred_check
          %p238 = pneg %p131
        $region26: #{stoch_trans_forward.1} parent=11 // pred_check_branch
          %240 = sbr.rel (%p238) target = $region28
        $region27: #{stoch_trans_forward.1} parent=11 // pred_region
          _
        $region28: #{stoch_trans_forward.1} parent=11 // pred_fallthru
          _
        // Predicated region
        $region29: #{stoch_trans_forward.1} parent=11 // pred_check
          %p241 = pneg %p152
        $region30: #{stoch_trans_forward.1} parent=11 // pred_check_branch
          %243 = sbr.rel (%p241) target = $region32
        $region31: #{stoch_trans_forward.1} parent=11 // pred_region
          _
        $region32: #{stoch_trans_forward.1} parent=11 // pred_fallthru
          _
      $region12: #{stoch_trans_forward.1} parent=5 // pred_fallthru
        _
      %p244 = scmp.lt.s32.totalorder %s21, 4
      // Predicated region
      $region33: #{stoch_trans_forward.1} parent=5 // pred_check
        %p245 = pneg %p244
      $region34: #{stoch_trans_forward.1} parent=5 // pred_check_branch
        %247 = sbr.rel (%p245) target = $region36
      $region35: #{stoch_trans_forward.1} parent=5 // pred_region
        // Predicated region
        $region37: #{stoch_trans_forward.1} parent=35 // pred_check
          %p248 = pneg %p41
        $region38: #{stoch_trans_forward.1} parent=35 // pred_check_branch
          %250 = sbr.rel (%p248) target = $region40
        $region39: #{stoch_trans_forward.1} parent=35 // pred_region
          %s251 = sand.u32 %s31, 1
          %s252 = sand.u32 %s31, 1
          %s253 = smul.addr %s252, 16
          %s254 = scalar_lea.vmem [#allocation2], %s253
          %s255 = smul.addr %s21, 8
          %s256 = scalar_lea.vmem %s0, %s255
          // Predicated region
          $region41: #{stoch_trans_forward.1} parent=39 // pred_check
            _
          $region42: #{stoch_trans_forward.1} parent=39 // pred_check_branch
            %258 = sbr.rel (0) target = $region44
          $region43: #{stoch_trans_forward.1} parent=39 // pred_region
            // Predicated region
            $region45: #{stoch_trans_forward.1} parent=43 // pred_check
              _
            $region46: #{stoch_trans_forward.1} parent=43 // pred_check_branch
              %260 = sbr.rel (0) target = $region48
            $region47: #{stoch_trans_forward.1} parent=43 // pred_region
              // Predicated region
              $region60: #{stoch_trans_forward.1} parent=47 // pred_check
                _
              $region61: #{stoch_trans_forward.1} parent=47 // pred_check_branch
                %278 = sbr.rel (0) target = $region63
              $region62: #{stoch_trans_forward.1} parent=47 // pred_region
                loop: start=0, step=1, limit=1
                $region64: #{stoch_trans_forward.1} parent=62 // loop_pre_header
                  _
                $region65: #{stoch_trans_forward.1} parent=62 // loop_header
                  %s280 = sphi 0, %s284
                  %p281 = scmp.ge.s32.totalorder %s280, 1
                  %s285 = sphi %s256, %s256
                  %s286 = sphi %s254, %s254
                $region66: #{stoch_trans_forward.1} parent=62 // loop_header_branch
                  %283 = sbr.rel (%p281) target = $region70
                $region67: #{stoch_trans_forward.1} parent=62 // loop_body
                  %v287 = vld [vmem:[%s285] sm:$0xff]
                  %288 = vst [vmem:[%s286] sm:$0xff] %v287
                  %v289 = vld [vmem:[%s285 + $0x20] sm:$0xff]
                  %290 = vst [vmem:[%s286 + $0x8] sm:$0xff] %v289
                $region68: #{stoch_trans_forward.1} parent=62 // loop_footer
                  %s284 = sadd.s32 1, %s280
                $region69: #{stoch_trans_forward.1} parent=62 // loop_footer_branch
                  %279 = sbr.rel target = $region65
                $region70: #{stoch_trans_forward.1} parent=62 // loop_exit
                  _
              $region63: #{stoch_trans_forward.1} parent=47 // pred_fallthru
                _
              // Predicated region
              $region71: #{stoch_trans_forward.1} parent=47 // pred_check
                _
              $region72: #{stoch_trans_forward.1} parent=47 // pred_check_branch
                %292 = sbr.rel target = $region74
              $region73: #{stoch_trans_forward.1} parent=47 // pred_region
                _
              $region74: #{stoch_trans_forward.1} parent=47 // pred_fallthru
                _
            $region48: #{stoch_trans_forward.1} parent=43 // pred_fallthru
              _
            // Predicated region
            $region49: #{stoch_trans_forward.1} parent=43 // pred_check
              _
            $region50: #{stoch_trans_forward.1} parent=43 // pred_check_branch
              %262 = sbr.rel target = $region52
            $region51: #{stoch_trans_forward.1} parent=43 // pred_region
              %s264 = ssub.s32 256, 1
              loop: start=0, step=1, limit=1
              $region53: #{stoch_trans_forward.1} parent=51 // loop_pre_header
                _
              $region54: #{stoch_trans_forward.1} parent=51 // loop_header
                %s266 = sphi 0, %s270
                %p267 = scmp.ge.s32.totalorder %s266, 1
                %s271 = sphi %s256, %s256
                %s272 = sphi %s254, %s254
              $region55: #{stoch_trans_forward.1} parent=51 // loop_header_branch
                %269 = sbr.rel (%p267) target = $region59
              $region56: #{stoch_trans_forward.1} parent=51 // loop_body
                %v273 = vld [vmem:[%s271] sm:%s264]
                %274 = vst [vmem:[%s272] sm:%s264] %v273
                %v275 = vld [vmem:[%s271 + $0x20] sm:%s264]
                %276 = vst [vmem:[%s272 + $0x8] sm:%s264] %v275
              $region57: #{stoch_trans_forward.1} parent=51 // loop_footer
                %s270 = sadd.s32 1, %s266
              $region58: #{stoch_trans_forward.1} parent=51 // loop_footer_branch
                %265 = sbr.rel target = $region54
              $region59: #{stoch_trans_forward.1} parent=51 // loop_exit
                _
            $region52: #{stoch_trans_forward.1} parent=43 // pred_fallthru
              _
          $region44: #{stoch_trans_forward.1} parent=39 // pred_fallthru
            _
          %293 = vnop
        $region40: #{stoch_trans_forward.1} parent=35 // pred_fallthru
          _
      $region36: #{stoch_trans_forward.1} parent=5 // pred_fallthru
        _
      %p294 = scmp.le.s32.totalorder 1, %s21
      %p295 = scmp.lt.s32.totalorder %s21, 5
      %p296 = pnand %p294, %p295
      %p297 = pneg %p296
      // Predicated region
      $region75: #{stoch_trans_forward.1} parent=5 // pred_check
        _
      $region76: #{stoch_trans_forward.1} parent=5 // pred_check_branch
        %299 = sbr.rel (%p296) target = $region78
      $region77: #{stoch_trans_forward.1} parent=5 // pred_region
        %s300 = ssub.s32 %s21, 1
        %s301 = sand.u32 %s34, 1
        %s302 = sand.u32 %s34, 1
        %s303 = smul.addr %s302, 16
        %s304 = scalar_lea.vmem [#allocation2], %s303
        // Predicated region
        $region79: #{stoch_trans_forward.1} parent=77 // pred_check
          %p305 = pneg %p47
        $region80: #{stoch_trans_forward.1} parent=77 // pred_check_branch
          %307 = sbr.rel (%p305) target = $region82
        $region81: #{stoch_trans_forward.1} parent=77 // pred_region
          _
        $region82: #{stoch_trans_forward.1} parent=77 // pred_fallthru
          _
        // Predicated region
        $region83: #{stoch_trans_forward.1} parent=77 // pred_check
          %p308 = pneg %p110
        $region84: #{stoch_trans_forward.1} parent=77 // pred_check_branch
          %310 = sbr.rel (%p308) target = $region86
        $region85: #{stoch_trans_forward.1} parent=77 // pred_region
          %311 = dma.done [#allocation4], 256
        $region86: #{stoch_trans_forward.1} parent=77 // pred_fallthru
          _
        %s312 = sand.u32 %s34, 1
        %s313 = sand.u32 %s34, 1
        %s314 = smul.addr %s313, 16
        %s315 = scalar_lea.vmem [#allocation2], %s314
        %p316 = pneg %p47
        %p317 = pneg %p44
        %p318 = pneg %p68
        %p319 = pneg %p65
        %p320 = pneg %p89
        %p321 = pneg %p86
        %p322 = pneg %p110
        %p323 = pneg %p107
        %p324 = pneg %p131
        %p325 = pneg %p128
        %p326 = pneg %p152
        %p327 = pneg %p149
        %p328 = pneg %p178
        %p329 = pneg %p175
        %s330 = sand.u32 %s165, 1
        %s331 = scalar_lea.sflag [#allocation5], %s330
        %s332 = sand.u32 %s165, 1
        %s333 = smul.addr %s332, 8
        %s334 = scalar_lea.vmem [#allocation6], %s333
        %p335 = pneg %p204
        %p336 = pneg %p201
        %s337 = sand.u32 %s191, 1
        %s338 = scalar_lea.sflag [#allocation8], %s337
        %s339 = sand.u32 %s191, 1
        %s340 = smul.addr %s339, 8
        %s341 = scalar_lea.vmem [#allocation7], %s340
        %v342 = vld [vmem:[%s304] sm:$0xff]
        %v343 = vld [vmem:[%s304 + $0x8] sm:$0xff]
        %v344 = vld [vmem:[%s1] sm:$0xff]
        %v345 = vld [vmem:[%s1 + $0x8] sm:$0xff]
        %v346 = vld [vmem:[%s1 + $0x10] sm:$0xff]
        %v347 = vld [vmem:[%s1 + $0x18] sm:$0xff]
        %v348 = vld [vmem:[%s4] sm:$0xff]
        %v349 = vld [vmem:[%s4 + $0x8] sm:$0xff]
        %v350 = vld [vmem:[%s4 + $0x10] sm:$0xff]
        %v351 = vld [vmem:[%s4 + $0x18] sm:$0xff]
        %353 = vset.pattern.permute.xlu0 0
        %354 = vperm.xlu0 %353, %v348
        %v355 = vpop.permute.xlu0 %354
        %358 = vset.pattern.permute.xlu0 0
        %359 = vperm.xlu0 %358, %v349
        %v360 = vpop.permute.xlu0 %359
        %363 = vset.pattern.permute.xlu0 0
        %364 = vperm.xlu0 %363, %v350
        %v365 = vpop.permute.xlu0 %364
        %368 = vset.pattern.permute.xlu0 0
        %369 = vperm.xlu0 %368, %v351
        %v370 = vpop.permute.xlu0 %369
        %vm372 = vcmask 130048
        %v374 = vsel %vm372, %v344, 0
        %v377 = vsel %vm372, %v345, 0
        %v380 = vsel %vm372, %v346, 0
        %v383 = vsel %vm372, %v347, 0
        %385 = vmatprep.subr.mxu0 0.0
        %386 = vmatpush1.msra.mxu0 0.0
        %387 = vmatprep.subr.mxu0 0.0
        %388 = vmatpush1.msra.mxu0 0.0
        %389 = vmatprep.subr.mxu0 0.0
        %390 = vmatpush1.msra.mxu0 0.0
        %391 = vmatprep.subr.mxu0 0.0
        %392 = vmatpush1.msra.mxu0 0.0
        %393 = vmatprep.subr.mxu0 0.0
        %394 = vmatpush1.msra.mxu0 0.0
        %395 = vmatprep.subr.mxu0 0.0
        %396 = vmatpush1.msra.mxu0 0.0
        %397 = vmatprep.subr.mxu0 0.0
        %398 = vmatpush1.msra.mxu0 0.0
        %399 = vmatprep.subr.mxu0 0.0
        %400 = vmatpush1.msra.mxu0 0.0
        %401 = vmatprep.subr.mxu0 0.0
        %402 = vmatpush1.msra.mxu0 0.0
        %403 = vmatprep.subr.mxu0 0.0
        %404 = vmatpush1.msra.mxu0 0.0
        %405 = vmatprep.subr.mxu0 0.0
        %406 = vmatpush1.msra.mxu0 0.0
        %407 = vmatprep.subr.mxu0 0.0
        %408 = vmatpush1.msra.mxu0 0.0
        %409 = vmatprep.subr.mxu0 0.0
        %410 = vmatpush1.msra.mxu0 0.0
        %411 = vmatprep.subr.mxu0 0.0
        %412 = vmatpush1.msra.mxu0 0.0
        %413 = vmatprep.subr.mxu0 0.0
        %414 = vmatpush1.msra.mxu0 %v343
        %415 = vmatprep.subr.mxu0 0.0
        %416 = vmatpush1.msra.mxu0 %v342
        %417 = vmatprep.subr.mxu0 0.0
        %418 = vmatpush2.msra.mxu0 0.0
        %419 = vmatprep.subr.mxu0 0.0
        %420 = vmatpush2.msra.mxu0 0.0
        %421 = vmatprep.subr.mxu0 0.0
        %422 = vmatpush2.msra.mxu0 0.0
        %423 = vmatprep.subr.mxu0 0.0
        %424 = vmatpush2.msra.mxu0 0.0
        %425 = vmatprep.subr.mxu0 0.0
        %426 = vmatpush2.msra.mxu0 0.0
        %427 = vmatprep.subr.mxu0 0.0
        %428 = vmatpush2.msra.mxu0 0.0
        %429 = vmatprep.subr.mxu0 0.0
        %430 = vmatpush2.msra.mxu0 0.0
        %431 = vmatprep.subr.mxu0 0.0
        %432 = vmatpush2.msra.mxu0 0.0
        %433 = vmatprep.subr.mxu0 0.0
        %434 = vmatpush2.msra.mxu0 0.0
        %435 = vmatprep.subr.mxu0 0.0
        %436 = vmatpush2.msra.mxu0 0.0
        %437 = vmatprep.subr.mxu0 0.0
        %438 = vmatpush2.msra.mxu0 0.0
        %439 = vmatprep.subr.mxu0 0.0
        %440 = vmatpush2.msra.mxu0 0.0
        %441 = vmatprep.subr.mxu0 0.0
        %442 = vmatpush2.msra.mxu0 0.0
        %443 = vmatprep.subr.mxu0 0.0
        %444 = vmatpush2.msra.mxu0 0.0
        %445 = vmatprep.subr.mxu0 0.0
        %446 = vmatpush2.msra.mxu0 0.0
        %447 = vmatprep.subr.mxu0 0.0
        %448 = vmatpush2.msra.mxu0 0.0
        %449 = vmatprep.mubr.f32.mxu0 0.0
        %450 = vmatmul.mubr.f32.gmra.mxu0 %v374
        %v451 = vpop.f32.mrf.mxu0
        %v452 = vadd.f32 %v355, %v451
        %v453 = vpop.f32.mrf.mxu0
        %454 = vmatprep.mubr.f32.mxu0 0.0
        %455 = vmatmul.mubr.f32.gmra.mxu0 %v377
        %v456 = vpop.f32.mrf.mxu0
        %v457 = vadd.f32 %v360, %v456
        %v458 = vpop.f32.mrf.mxu0
        %459 = vmatprep.mubr.f32.mxu0 0.0
        %460 = vmatmul.mubr.f32.gmra.mxu0 %v380
        %v461 = vpop.f32.mrf.mxu0
        %v462 = vadd.f32 %v365, %v461
        %v463 = vpop.f32.mrf.mxu0
        %464 = vmatprep.mubr.f32.mxu0 0.0
        %465 = vmatmul.mubr.f32.gmra.mxu0 %v383
        %v466 = vpop.f32.mrf.mxu0
        %v467 = vadd.f32 %v370, %v466
        %v468 = vpop.f32.mrf.mxu0
        %469 = vdwg.mxu0
        %v470 = vtanh.pop %v452
        %v471 = vtanh.pop %v457
        %v472 = vtanh.pop %v462
        %v473 = vtanh.pop %v467
        %v474 = vld [vmem:[%s2] sm:$0xff]
        %v475 = vld [vmem:[%s2 + $0x8] sm:$0xff]
        %v476 = vld [vmem:[%s2 + $0x10] sm:$0xff]
        %v477 = vld [vmem:[%s2 + $0x18] sm:$0xff]
        %478 = vset.pattern.permute.xlu0 1
        %479 = vperm.xlu0 %478, %v348
        %v480 = vpop.permute.xlu0 %479
        %482 = vset.pattern.permute.xlu0 1
        %483 = vperm.xlu0 %482, %v349
        %v484 = vpop.permute.xlu0 %483
        %486 = vset.pattern.permute.xlu0 1
        %487 = vperm.xlu0 %486, %v350
        %v488 = vpop.permute.xlu0 %487
        %490 = vset.pattern.permute.xlu0 1
        %491 = vperm.xlu0 %490, %v351
        %v492 = vpop.permute.xlu0 %491
        %vm494 = vcmask 261120
        %v496 = vsel %vm494, %v474, 0
        %v499 = vsel %vm494, %v475, 0
        %v502 = vsel %vm494, %v476, 0
        %v505 = vsel %vm494, %v477, 0
        %507 = vmatprep.subr.mxu0 0.0
        %508 = vmatpush1.msra.mxu0 0.0
        %509 = vmatprep.subr.mxu0 0.0
        %510 = vmatpush1.msra.mxu0 0.0
        %511 = vmatprep.subr.mxu0 0.0
        %512 = vmatpush1.msra.mxu0 0.0
        %513 = vmatprep.subr.mxu0 0.0
        %514 = vmatpush1.msra.mxu0 0.0
        %515 = vmatprep.subr.mxu0 0.0
        %516 = vmatpush1.msra.mxu0 0.0
        %517 = vmatprep.subr.mxu0 0.0
        %518 = vmatpush1.msra.mxu0 0.0
        %519 = vmatprep.subr.mxu0 0.0
        %520 = vmatpush1.msra.mxu0 0.0
        %521 = vmatprep.subr.mxu0 0.0
        %522 = vmatpush1.msra.mxu0 0.0
        %523 = vmatprep.subr.mxu0 0.0
        %524 = vmatpush1.msra.mxu0 0.0
        %525 = vmatprep.subr.mxu0 0.0
        %526 = vmatpush1.msra.mxu0 0.0
        %527 = vmatprep.subr.mxu0 0.0
        %528 = vmatpush1.msra.mxu0 0.0
        %529 = vmatprep.subr.mxu0 0.0
        %530 = vmatpush1.msra.mxu0 0.0
        %531 = vmatprep.subr.mxu0 0.0
        %532 = vmatpush1.msra.mxu0 %v473
        %533 = vmatprep.subr.mxu0 0.0
        %534 = vmatpush1.msra.mxu0 %v472
        %535 = vmatprep.subr.mxu0 0.0
        %536 = vmatpush1.msra.mxu0 %v471
        %537 = vmatprep.subr.mxu0 0.0
        %538 = vmatpush1.msra.mxu0 %v470
        %539 = vmatprep.subr.mxu0 0.0
        %540 = vmatpush2.msra.mxu0 0.0
        %541 = vmatprep.subr.mxu0 0.0
        %542 = vmatpush2.msra.mxu0 0.0
        %543 = vmatprep.subr.mxu0 0.0
        %544 = vmatpush2.msra.mxu0 0.0
        %545 = vmatprep.subr.mxu0 0.0
        %546 = vmatpush2.msra.mxu0 0.0
        %547 = vmatprep.subr.mxu0 0.0
        %548 = vmatpush2.msra.mxu0 0.0
        %549 = vmatprep.subr.mxu0 0.0
        %550 = vmatpush2.msra.mxu0 0.0
        %551 = vmatprep.subr.mxu0 0.0
        %552 = vmatpush2.msra.mxu0 0.0
        %553 = vmatprep.subr.mxu0 0.0
        %554 = vmatpush2.msra.mxu0 0.0
        %555 = vmatprep.subr.mxu0 0.0
        %556 = vmatpush2.msra.mxu0 0.0
        %557 = vmatprep.subr.mxu0 0.0
        %558 = vmatpush2.msra.mxu0 0.0
        %559 = vmatprep.subr.mxu0 0.0
        %560 = vmatpush2.msra.mxu0 0.0
        %561 = vmatprep.subr.mxu0 0.0
        %562 = vmatpush2.msra.mxu0 0.0
        %563 = vmatprep.subr.mxu0 0.0
        %564 = vmatpush2.msra.mxu0 0.0
        %565 = vmatprep.subr.mxu0 0.0
        %566 = vmatpush2.msra.mxu0 0.0
        %567 = vmatprep.subr.mxu0 0.0
        %568 = vmatpush2.msra.mxu0 0.0
        %569 = vmatprep.subr.mxu0 0.0
        %570 = vmatpush2.msra.mxu0 0.0
        %571 = vmatprep.mubr.f32.mxu0 0.0
        %572 = vmatmul.mubr.f32.gmra.mxu0 %v496
        %v573 = vpop.f32.mrf.mxu0
        %v574 = vadd.f32 %v480, %v573
        %v575 = vpop.f32.mrf.mxu0
        %576 = vmatprep.mubr.f32.mxu0 0.0
        %577 = vmatmul.mubr.f32.gmra.mxu0 %v499
        %v578 = vpop.f32.mrf.mxu0
        %v579 = vadd.f32 %v484, %v578
        %v580 = vpop.f32.mrf.mxu0
        %581 = vmatprep.mubr.f32.mxu0 0.0
        %582 = vmatmul.mubr.f32.gmra.mxu0 %v502
        %v583 = vpop.f32.mrf.mxu0
        %v584 = vadd.f32 %v488, %v583
        %v585 = vpop.f32.mrf.mxu0
        %586 = vmatprep.mubr.f32.mxu0 0.0
        %587 = vmatmul.mubr.f32.gmra.mxu0 %v505
        %v588 = vpop.f32.mrf.mxu0
        %v589 = vadd.f32 %v492, %v588
        %v590 = vpop.f32.mrf.mxu0
        %591 = vdwg.mxu0
        %v592 = vtanh.pop %v574
        %v593 = vtanh.pop %v579
        %v594 = vtanh.pop %v584
        %v595 = vtanh.pop %v589
        %v596 = vld [vmem:[#allocation3] sm:$0xff]
        %v597 = vld [vmem:[#allocation3 + $0x8] sm:$0xff]
        %v598 = vld [vmem:[%s5] sm:$0xff]
        %v599 = vld [vmem:[%s5 + $0x8] sm:$0xff]
        %601 = vset.pattern.permute.xlu0 0
        %602 = vperm.xlu0 %601, %v598
        %v603 = vpop.permute.xlu0 %602
        %606 = vset.pattern.permute.xlu0 0
        %607 = vperm.xlu0 %606, %v599
        %v608 = vpop.permute.xlu0 %607
        %v611 = vsel %vm494, %v596, 0
        %v614 = vsel %vm494, %v597, 0
        %616 = vmatprep.subr.mxu0 0.0
        %617 = vmatpush1.msra.mxu0 0.0
        %618 = vmatprep.subr.mxu0 0.0
        %619 = vmatpush1.msra.mxu0 0.0
        %620 = vmatprep.subr.mxu0 0.0
        %621 = vmatpush1.msra.mxu0 0.0
        %622 = vmatprep.subr.mxu0 0.0
        %623 = vmatpush1.msra.mxu0 0.0
        %624 = vmatprep.subr.mxu0 0.0
        %625 = vmatpush1.msra.mxu0 0.0
        %626 = vmatprep.subr.mxu0 0.0
        %627 = vmatpush1.msra.mxu0 0.0
        %628 = vmatprep.subr.mxu0 0.0
        %629 = vmatpush1.msra.mxu0 0.0
        %630 = vmatprep.subr.mxu0 0.0
        %631 = vmatpush1.msra.mxu0 0.0
        %632 = vmatprep.subr.mxu0 0.0
        %633 = vmatpush1.msra.mxu0 0.0
        %634 = vmatprep.subr.mxu0 0.0
        %635 = vmatpush1.msra.mxu0 0.0
        %636 = vmatprep.subr.mxu0 0.0
        %637 = vmatpush1.msra.mxu0 0.0
        %638 = vmatprep.subr.mxu0 0.0
        %639 = vmatpush1.msra.mxu0 0.0
        %640 = vmatprep.subr.mxu0 0.0
        %641 = vmatpush1.msra.mxu0 %v595
        %642 = vmatprep.subr.mxu0 0.0
        %643 = vmatpush1.msra.mxu0 %v594
        %644 = vmatprep.subr.mxu0 0.0
        %645 = vmatpush1.msra.mxu0 %v593
        %646 = vmatprep.subr.mxu0 0.0
        %647 = vmatpush1.msra.mxu0 %v592
        %648 = vmatprep.subr.mxu0 0.0
        %649 = vmatpush2.msra.mxu0 0.0
        %650 = vmatprep.subr.mxu0 0.0
        %651 = vmatpush2.msra.mxu0 0.0
        %652 = vmatprep.subr.mxu0 0.0
        %653 = vmatpush2.msra.mxu0 0.0
        %654 = vmatprep.subr.mxu0 0.0
        %655 = vmatpush2.msra.mxu0 0.0
        %656 = vmatprep.subr.mxu0 0.0
        %657 = vmatpush2.msra.mxu0 0.0
        %658 = vmatprep.subr.mxu0 0.0
        %659 = vmatpush2.msra.mxu0 0.0
        %660 = vmatprep.subr.mxu0 0.0
        %661 = vmatpush2.msra.mxu0 0.0
        %662 = vmatprep.subr.mxu0 0.0
        %663 = vmatpush2.msra.mxu0 0.0
        %664 = vmatprep.subr.mxu0 0.0
        %665 = vmatpush2.msra.mxu0 0.0
        %666 = vmatprep.subr.mxu0 0.0
        %667 = vmatpush2.msra.mxu0 0.0
        %668 = vmatprep.subr.mxu0 0.0
        %669 = vmatpush2.msra.mxu0 0.0
        %670 = vmatprep.subr.mxu0 0.0
        %671 = vmatpush2.msra.mxu0 0.0
        %672 = vmatprep.subr.mxu0 0.0
        %673 = vmatpush2.msra.mxu0 0.0
        %674 = vmatprep.subr.mxu0 0.0
        %675 = vmatpush2.msra.mxu0 0.0
        %676 = vmatprep.subr.mxu0 0.0
        %677 = vmatpush2.msra.mxu0 0.0
        %678 = vmatprep.subr.mxu0 0.0
        %679 = vmatpush2.msra.mxu0 0.0
        %680 = vmatprep.mubr.f32.mxu0 0.0
        %681 = vmatmul.mubr.f32.gmra.mxu0 %v611
        %v682 = vpop.f32.mrf.mxu0
        %v683 = vadd.f32 %v603, %v682
        %v684 = vpop.f32.mrf.mxu0
        %685 = vmatprep.mubr.f32.mxu0 0.0
        %686 = vmatmul.mubr.f32.gmra.mxu0 %v614
        %v687 = vpop.f32.mrf.mxu0
        %v688 = vadd.f32 %v608, %v687
        %v689 = vpop.f32.mrf.mxu0
        %690 = vdwg.mxu0
        %691 = vst [vmem:[%s334] sm:$0xff] %v683
        %v692 = vmul.f32 %v688, 1.442695
        %v693 = vpow.pop %v692
        %694 = vst [vmem:[%s341] sm:$0xff] %v693
        %s695 = sand.u32 %s165, 1
        %s696 = scalar_lea.sflag [#allocation5], %s695
        %s697 = sand.u32 %s165, 1
        %s698 = smul.addr %s697, 8
        %s699 = scalar_lea.vmem [#allocation6], %s698
        %s700 = sand.u32 %s191, 1
        %s701 = scalar_lea.sflag [#allocation8], %s700
        %s702 = sand.u32 %s191, 1
        %s703 = smul.addr %s702, 8
        %s704 = scalar_lea.vmem [#allocation7], %s703
        // Predicated region
        $region87: #{stoch_trans_forward.1} parent=77 // pred_check
          %p705 = pneg %p175
        $region88: #{stoch_trans_forward.1} parent=77 // pred_check_branch
          %707 = sbr.rel (%p705) target = $region90
        $region89: #{stoch_trans_forward.1} parent=77 // pred_region
          %s709 = ssub.s32 128, 128
          %710 = vsyncadd %s696, %s709
          %s711 = smul.addr %s26, 128
          %s712 = scalar_lea.hbm %s6, %s711
          %s714 = sshll.u32 %s699, 4
          %s715 = int_to_ptr.vmem [resolvable:$true] %s714
          %717 = dma.vmem_to_hbm [thread:$0]  %s715, 128, %s712, %s696
        $region90: #{stoch_trans_forward.1} parent=77 // pred_fallthru
          _
        // Predicated region
        $region91: #{stoch_trans_forward.1} parent=77 // pred_check
          %p718 = pneg %p201
        $region92: #{stoch_trans_forward.1} parent=77 // pred_check_branch
          %720 = sbr.rel (%p718) target = $region94
        $region93: #{stoch_trans_forward.1} parent=77 // pred_region
          %s722 = ssub.s32 128, 128
          %723 = vsyncadd %s701, %s722
          %s724 = smul.addr %s26, 128
          %s725 = scalar_lea.hbm %s7, %s724
          %s727 = sshll.u32 %s704, 4
          %s728 = int_to_ptr.vmem [resolvable:$true] %s727
          %730 = dma.vmem_to_hbm [thread:$0]  %s728, 128, %s725, %s701
        $region94: #{stoch_trans_forward.1} parent=77 // pred_fallthru
          _
      $region78: #{stoch_trans_forward.1} parent=5 // pred_fallthru
        _
      %p731 = scmp.le.s32.totalorder 2, %s21
      // Predicated region
      $region95: #{stoch_trans_forward.1} parent=5 // pred_check
        %p732 = pneg %p731
      $region96: #{stoch_trans_forward.1} parent=5 // pred_check_branch
        %734 = sbr.rel (%p732) target = $region98
      $region97: #{stoch_trans_forward.1} parent=5 // pred_region
        %s735 = ssub.s32 %s21, 2
        // Predicated region
        $region99: #{stoch_trans_forward.1} parent=97 // pred_check
          %p736 = pneg %p181
        $region100: #{stoch_trans_forward.1} parent=97 // pred_check_branch
          %738 = sbr.rel (%p736) target = $region102
        $region101: #{stoch_trans_forward.1} parent=97 // pred_region
          %s739 = sand.u32 %s166, 1
          %s740 = scalar_lea.sflag [#allocation5], %s739
          %s741 = sand.u32 %s166, 1
          %s742 = smul.addr %s741, 8
          %s743 = scalar_lea.vmem [#allocation6], %s742
          %744 = dma.done %s740, 128
        $region102: #{stoch_trans_forward.1} parent=97 // pred_fallthru
          _
        // Predicated region
        $region103: #{stoch_trans_forward.1} parent=97 // pred_check
          %p745 = pneg %p207
        $region104: #{stoch_trans_forward.1} parent=97 // pred_check_branch
          %747 = sbr.rel (%p745) target = $region106
        $region105: #{stoch_trans_forward.1} parent=97 // pred_region
          %s748 = sand.u32 %s192, 1
          %s749 = scalar_lea.sflag [#allocation8], %s748
          %s750 = sand.u32 %s192, 1
          %s751 = smul.addr %s750, 8
          %s752 = scalar_lea.vmem [#allocation7], %s751
          %753 = dma.done %s749, 128
        $region106: #{stoch_trans_forward.1} parent=97 // pred_fallthru
          _
      $region98: #{stoch_trans_forward.1} parent=5 // pred_fallthru
        _
    $region6: #{stoch_trans_forward.1} parent=1 // loop_footer
      %s25 = sadd.s32 1, %s21
    $region7: #{stoch_trans_forward.1} parent=1 // loop_footer_branch
      %20 = sbr.rel target = $region3
    $region8: #{stoch_trans_forward.1} parent=1 // loop_exit
      _
    %754 = vsyncpa [#allocation4], 1
    %s755 = scalar_lea.sflag [#allocation4], 1
    %756 = vsyncpa %s755, 1
    %757 = vsyncpa [#allocation5], 1
    %s758 = scalar_lea.sflag [#allocation5], 1
    %759 = vsyncpa %s758, 1
    %760 = vsyncpa [#allocation8], 1
    %s761 = scalar_lea.sflag [#allocation8], 1
    %762 = vsyncpa %s761, 1

</llo_original>
